<compile_context>
chip_gen: v7x
topology: tpu7x:2x2x1
jax: 0.10.0
libtpu: 0.0.40
codegen_flags: <defaults>
</compile_context>

<pallas_src>
import numpy as np
import jax
import jax.numpy as jnp
from jax.experimental import pallas as pl
from jax.experimental.pallas import tpu as pltpu


# ----------------------------------------------------------------------------
# Pallas kernel: voxel feature encoder on [C*P, tile_n] blocks
# ----------------------------------------------------------------------------
def _encoder_kernel(feat_ref, npts_ref, pidx_ref, start_ref, inv_ref, out_ref):
    # feat_ref : [CP, TN] f32   (CP = C*P, row r -> channel r // P, point r % P)
    # npts_ref : [1, TN]  int32 points-in-voxel per lane (voxel)
    # pidx_ref : [CP, 1]  int32 point index (r % P) per row
    # start_ref: [CP, 1]  f32 per-row subtract
    # inv_ref  : [CP, 1]  f32 per-row reciprocal of the norm divisor
    mask = (pidx_ref[...] < npts_ref[...]).astype(out_ref.dtype)      # [CP, TN]
    out_ref[...] = (feat_ref[...] - start_ref[...]) * inv_ref[...] * mask


def _choose_tile_n(n_rounded_128: int, requested: int) -> int:
    tn = min(requested, n_rounded_128)
    tn = max(128, (tn // 128) * 128)
    # Keep at least 2 grid steps when there is enough work so v7x's two
    # TensorCores can both take "parallel" grid slices.
    if n_rounded_128 // tn < 2 and n_rounded_128 >= 256:
        tn = max(128, ((n_rounded_128 // 2) // 128) * 128)
    return tn


def voxel_feature_encoder(feat_cpn, num_points_in_voxel, norm_start, norm_div,
                          tile_n: int = 8192):
    """feat_cpn: [C, P, N] f32, num_points_in_voxel: [N] int -> [1, C, P, N]."""
    C, P, N = feat_cpn.shape
    CP = C * P
    assert CP % 8 == 0, "C*P must be a multiple of 8 (sublane granularity)"

    n128 = pl.cdiv(N, 128) * 128
    tn = _choose_tile_n(n128, tile_n)
    n_pad = pl.cdiv(N, tn) * tn

    feat2d = feat_cpn.reshape(CP, N)                     # free reshape (contiguous)
    npts = num_points_in_voxel.astype(jnp.int32)
    if n_pad != N:
        feat2d = jnp.pad(feat2d, ((0, 0), (0, n_pad - N)))
        npts = jnp.pad(npts, (0, n_pad - N))
    npts = npts.reshape(1, n_pad)

    # Per-row constants for the channel-major / point-minor flattening of [C, P].
    start_np = np.asarray(norm_start, np.float32)
    div_np = np.asarray(norm_div, np.float32)
    div_np = np.where(np.abs(div_np) < 1e-12, 1.0, div_np)   # guard divide-by-zero
    start_col = jnp.asarray(np.repeat(start_np, P).reshape(CP, 1))
    inv_col = jnp.asarray((1.0 / div_np).repeat(P).reshape(CP, 1).astype(np.float32))
    pidx_col = jnp.asarray(np.tile(np.arange(P, dtype=np.int32), C).reshape(CP, 1))

    out = pl.pallas_call(
        _encoder_kernel,
        out_shape=jax.ShapeDtypeStruct((CP, n_pad), feat_cpn.dtype),
        grid_spec=pltpu.PrefetchScalarGridSpec(
            num_scalar_prefetch=0,
            grid=(n_pad // tn,),
            in_specs=[
                pl.BlockSpec((CP, tn), lambda i: (0, i)),
                pl.BlockSpec((1, tn), lambda i: (0, i)),
                pl.BlockSpec((CP, 1), lambda i: (0, 0)),
                pl.BlockSpec((CP, 1), lambda i: (0, 0)),
                pl.BlockSpec((CP, 1), lambda i: (0, 0)),
            ],
            out_specs=pl.BlockSpec((CP, tn), lambda i: (0, i)),
        ),
        compiler_params=pltpu.CompilerParams(
            dimension_semantics=("parallel",),
            # 2 MiB blocks x (2 in + 2 out buffers) + small constants << 32 MiB;
            # 32 MiB is within v7x's scoped default and physical 64 MiB VMEM.
            vmem_limit_bytes=32 * 1024 * 1024),
    )(feat2d, npts, pidx_col, start_col, inv_col)

    if n_pad != N:
        out = out[:, :N]
    return out.reshape(C, P, N)[None]                    # [1, C, P, N]


# ----------------------------------------------------------------------------
# Plain-JAX hard voxelization (BatchVoxelization equivalent, static shapes).
# Emits the voxel features channel-major [C, P, V] so no transpose pass over
# the (large) voxel feature tensor is ever required.
# ----------------------------------------------------------------------------
def voxelize_single(points, pc_range, voxel_size, max_voxels, max_points):
    """points: [Np, C] -> voxel_feature [C, P, V], coors (z,y,x) [V,3], num_points [V]."""
    Np, C = points.shape
    pc_lo = jnp.asarray(pc_range[:3], jnp.float32)
    vs = jnp.asarray(voxel_size, jnp.float32)
    grid = np.round((np.asarray(pc_range[3:]) - np.asarray(pc_range[:3]))
                    / np.asarray(voxel_size)).astype(np.int32)    # static [gx,gy,gz]

    coords = jnp.floor((points[:, :3] - pc_lo) / vs).astype(jnp.int32)   # [Np,3] x,y,z
    valid = jnp.all((coords >= 0) & (coords < jnp.asarray(grid)), axis=1)
    vid = (coords[:, 2] * int(grid[1]) * int(grid[0])
           + coords[:, 1] * int(grid[0]) + coords[:, 0])
    BIG = jnp.int32(2 ** 30)
    vid = jnp.where(valid, vid, BIG)

    order = jnp.argsort(vid)                     # stable
    vid_s = vid[order]
    pts_s = points[order]
    crd_s = coords[order]

    new_seg = jnp.concatenate([jnp.ones((1,), bool), vid_s[1:] != vid_s[:-1]])
    seg_id = jnp.cumsum(new_seg.astype(jnp.int32)) - 1
    idx = jnp.arange(Np)
    seg_start = jax.lax.cummax(jnp.where(new_seg, idx, 0))
    pos = idx - seg_start
    pt_valid = vid_s < BIG

    ok = pt_valid & (seg_id < max_voxels) & (pos < max_points)
    # point-slot-major flat index: scatter lands directly in [P, V] layout.
    flat = jnp.where(ok, pos * max_voxels + seg_id, max_voxels * max_points)
    vf = (jnp.zeros((C, max_voxels * max_points + 1), points.dtype)
          .at[:, flat].set(pts_s.T))
    voxel_feature = vf[:, :-1].reshape(C, max_points, max_voxels)   # [C, P, V]

    num_points = (jnp.zeros((max_voxels + 1,), jnp.int32)
                  .at[jnp.where(ok, seg_id, max_voxels)].add(1))[:-1]

    head_ok = new_seg & pt_valid & (seg_id < max_voxels)
    cidx = jnp.where(head_ok, seg_id, max_voxels)
    coors_zyx = jnp.stack([crd_s[:, 2], crd_s[:, 1], crd_s[:, 0]], axis=1)
    coors = (jnp.full((max_voxels + 1, 3), -1, jnp.int32)
             .at[cidx].set(coors_zyx))[:-1]
    return voxel_feature, coors, num_points


# ----------------------------------------------------------------------------
# CenterPointPreProcess forward
# ----------------------------------------------------------------------------
class CenterPointPreProcess:
    def __init__(self, pc_range, voxel_size, max_voxels_num=128,
                 max_points_in_voxel=16, norm_range=None, norm_dims=None):
        self.pc_range = pc_range
        self.voxel_size = voxel_size
        self.max_voxels_num = max_voxels_num
        self.max_points_in_voxel = max_points_in_voxel
        self.norm_range = norm_range
        self.norm_dims = norm_dims

    def _norm_constants(self, C):
        start = np.zeros((C,), np.float32)
        div = np.ones((C,), np.float32)
        if self.norm_range is not None and self.norm_dims is not None:
            half = len(self.norm_range) // 2
            for idx, dim in enumerate(self.norm_dims):
                start[dim] = self.norm_range[idx]
                div[dim] = self.norm_range[idx + half] - self.norm_range[idx]
        return start, div

    def __call__(self, points_lst, is_deploy=False):
        feats, coors_b, npts = [], [], []
        for b, pts in enumerate(points_lst):
            vf, co, n = voxelize_single(pts, self.pc_range, self.voxel_size,
                                        self.max_voxels_num,
                                        self.max_points_in_voxel)
            feats.append(vf)                                       # [C, P, V]
            npts.append(n)
            coors_b.append(jnp.concatenate(
                [jnp.full((co.shape[0], 1), b, jnp.int32), co], axis=1))
        feat_cpn = jnp.concatenate(feats, axis=2)                  # [C, P, B*V]
        num_points = jnp.concatenate(npts, axis=0)                 # [B*V]
        coors_batch = jnp.concatenate(coors_b, axis=0)             # [B*V, 4]

        start, div = self._norm_constants(feat_cpn.shape[0])
        features = voxel_feature_encoder(feat_cpn, num_points, start, div)
        return features, coors_batch


# ----------------------------------------------------------------------------
# Reference (plain jnp) for the feature encoder, for a correctness check
# ----------------------------------------------------------------------------
def reference_encoder(features_npc, num_points, norm_range, norm_dims):
    f = features_npc                                               # [N, P, C]
    half = len(norm_range) // 2
    for idx, dim in enumerate(norm_dims):
        start = norm_range[idx]
        norm = norm_range[idx + half] - norm_range[idx]
        f = f.at[:, :, dim].set((f[:, :, dim] - start) / norm)
    P = f.shape[1]
    mask = (jnp.arange(P)[None, :] < num_points[:, None]).astype(f.dtype)
    f = f * mask[:, :, None]
    return jnp.transpose(f, (2, 1, 0))[None]                       # [1, C, P, N]


if __name__ == "__main__":
    key = jax.random.PRNGKey(0)
    B = 2
    NUM_POINTS = 400
    C = 4                                  # (x, y, z, intensity)
    pc_range = [-2.0, -2.0, -1.0, 2.0, 2.0, 1.0]
    voxel_size = [0.25, 0.25, 2.0]         # grid = 16 x 16 x 1
    max_voxels = 128                       # per sample -> N = 256 total
    max_points = 16
    norm_range = [-2.0, -2.0, -1.0, 2.0, 2.0, 1.0]
    norm_dims = [0, 1, 2]

    keys = jax.random.split(key, B)
    points_lst = []
    for b in range(B):
        xyz = jax.random.uniform(keys[b], (NUM_POINTS, 3),
                                 minval=-2.3, maxval=2.3, dtype=jnp.float32)
        inten = jax.random.uniform(jax.random.fold_in(keys[b], 7),
                                   (NUM_POINTS, 1), dtype=jnp.float32)
        points_lst.append(jnp.concatenate([xyz, inten], axis=1))

    module = CenterPointPreProcess(pc_range, voxel_size, max_voxels,
                                   max_points, norm_range, norm_dims)
    features, coors_batch = module(points_lst)
    features = jax.block_until_ready(features)
    coors_batch = jax.block_until_ready(coors_batch)

    # sanity check against plain-JAX reference of the encoder hot path
    vfs, nps = [], []
    for pts in points_lst:
        vf, _, n = voxelize_single(pts, pc_range, voxel_size, max_voxels, max_points)
        vfs.append(jnp.transpose(vf, (2, 1, 0)))    # back to [V, P, C] (test only)
        nps.append(n)
    ref = reference_encoder(jnp.concatenate(vfs, 0), jnp.concatenate(nps, 0),
                            norm_range, norm_dims)
    assert features.shape == (1, C, max_points, B * max_voxels)
    assert coors_batch.shape == (B * max_voxels, 4)
    np.testing.assert_allclose(np.asarray(features), np.asarray(ref),
                               rtol=1e-5, atol=1e-6)
    print("KERNEL_OK")
</pallas_src>

<mosaic_0001>
module attributes {stable_mosaic.version = 11 : i64} {
  func.func @_encoder_kernel(%arg0: i32, %arg1: memref<64x128xf32, #tpu.memory_space<vmem>>, %arg2: memref<1x128xi32, #tpu.memory_space<vmem>>, %arg3: memref<64x1xi32, #tpu.memory_space<vmem>>, %arg4: memref<64x1xf32, #tpu.memory_space<vmem>>, %arg5: memref<64x1xf32, #tpu.memory_space<vmem>>, %arg6: memref<64x128xf32, #tpu.memory_space<vmem>>) attributes {dimension_semantics = [#tpu.dimension_semantics<parallel>], iteration_bounds = array<i64: 2>, scalar_prefetch = 0 : i64, scratch_operands = 0 : i64, tpu.core_type = #tpu.core_type<tc>, window_params = [{transform_indices = @transform_0, window_bounds = array<i64: 64, 128>}, {transform_indices = @transform_1, window_bounds = array<i64: 1, 128>}, {pipeline_mode = #tpu.pipeline_mode<synchronous>, transform_indices = @transform_2, window_bounds = array<i64: 64, 1>}, {pipeline_mode = #tpu.pipeline_mode<synchronous>, transform_indices = @transform_3, window_bounds = array<i64: 64, 1>}, {pipeline_mode = #tpu.pipeline_mode<synchronous>, transform_indices = @transform_4, window_bounds = array<i64: 64, 1>}, {transform_indices = @transform_5, window_bounds = array<i64: 64, 128>}]} {
    %c0 = arith.constant 0 : index
    %c0_0 = arith.constant 0 : index
    %0 = vector.load %arg3[%c0, %c0_0] : memref<64x1xi32, #tpu.memory_space<vmem>>, vector<64x1xi32>
    %c0_1 = arith.constant 0 : index
    %c0_2 = arith.constant 0 : index
    %1 = vector.load %arg2[%c0_1, %c0_2] : memref<1x128xi32, #tpu.memory_space<vmem>>, vector<1x128xi32>
    %2 = vector.broadcast %0 : vector<64x1xi32> to vector<64x128xi32>
    %3 = vector.broadcast %1 : vector<1x128xi32> to vector<64x128xi32>
    %4 = arith.cmpi slt, %2, %3 : vector<64x128xi32>
    %5 = arith.extui %4 : vector<64x128xi1> to vector<64x128xi32>
    %6 = arith.sitofp %5 : vector<64x128xi32> to vector<64x128xf32>
    %c0_3 = arith.constant 0 : index
    %c0_4 = arith.constant 0 : index
    %7 = vector.load %arg1[%c0_3, %c0_4] : memref<64x128xf32, #tpu.memory_space<vmem>>, vector<64x128xf32>
    %c0_5 = arith.constant 0 : index
    %c0_6 = arith.constant 0 : index
    %8 = vector.load %arg4[%c0_5, %c0_6] : memref<64x1xf32, #tpu.memory_space<vmem>>, vector<64x1xf32>
    %9 = vector.broadcast %8 : vector<64x1xf32> to vector<64x128xf32>
    %10 = arith.subf %7, %9 : vector<64x128xf32>
    %c0_7 = arith.constant 0 : index
    %c0_8 = arith.constant 0 : index
    %11 = vector.load %arg5[%c0_7, %c0_8] : memref<64x1xf32, #tpu.memory_space<vmem>>, vector<64x1xf32>
    %12 = vector.broadcast %11 : vector<64x1xf32> to vector<64x128xf32>
    %13 = arith.mulf %10, %12 : vector<64x128xf32>
    %14 = arith.mulf %13, %6 : vector<64x128xf32>
    %c0_9 = arith.constant 0 : index
    %c0_10 = arith.constant 0 : index
    %15 = vector.load %arg6[%c0_9, %c0_10] : memref<64x128xf32, #tpu.memory_space<vmem>>, vector<64x128xf32>
    tpu.vector_store %arg6[%c0_9, %c0_10], %14 {strides = array<i32>} : memref<64x128xf32, #tpu.memory_space<vmem>>, vector<64x128xf32>,
    return
  }
  func.func @transform_0(%arg0: i32) -> (i32, i32) {
    %c0_i32 = arith.constant 0 : i32
    %c0_i32_0 = arith.constant 0 : i32
    return %c0_i32, %arg0 : i32, i32
  }
  func.func @transform_1(%arg0: i32) -> (i32, i32) {
    %c0_i32 = arith.constant 0 : i32
    %c0_i32_0 = arith.constant 0 : i32
    return %c0_i32, %arg0 : i32, i32
  }
  func.func @transform_2(%arg0: i32) -> (i32, i32) {
    %c0_i32 = arith.constant 0 : i32
    %c0_i32_0 = arith.constant 0 : i32
    %c0_i32_1 = arith.constant 0 : i32
    return %c0_i32, %c0_i32_0 : i32, i32
  }
  func.func @transform_3(%arg0: i32) -> (i32, i32) {
    %c0_i32 = arith.constant 0 : i32
    %c0_i32_0 = arith.constant 0 : i32
    %c0_i32_1 = arith.constant 0 : i32
    return %c0_i32, %c0_i32_0 : i32, i32
  }
  func.func @transform_4(%arg0: i32) -> (i32, i32) {
    %c0_i32 = arith.constant 0 : i32
    %c0_i32_0 = arith.constant 0 : i32
    %c0_i32_1 = arith.constant 0 : i32
    return %c0_i32, %c0_i32_0 : i32, i32
  }
  func.func @transform_5(%arg0: i32) -> (i32, i32) {
    %c0_i32 = arith.constant 0 : i32
    %c0_i32_0 = arith.constant 0 : i32
    return %c0_i32, %arg0 : i32, i32
  }
}

</mosaic_0001>

<llo_original>
// kernel: tpu_custom_call.1
$region0: #{tpu_custom_call.1}
  #allocation0 [shape = 'u32[]', space=smem, size = 0x4, offset = 0x4, fixed_abs, tag = 'smem constant byte address 0x4 - core index']
  #allocation1 [shape = 'u32[144,128]{1,0:T(1,128)}', space=vmem, size = 0x12000, scoped, tag = 'internal scratch']
  %s0 = inlined_call_operand.vmem [shape: f32[64,256], index: 0, kind: input, shape index: {}]
  %s1 = inlined_call_operand.vmem [shape: s32[1,256], index: 1, kind: input, shape index: {}]
  %s2 = inlined_call_operand.vmem [shape: s32[64,1], index: 2, kind: input, shape index: {}]
  %s3 = inlined_call_operand.vmem [shape: f32[64,1], index: 3, kind: input, shape index: {}]
  %s4 = inlined_call_operand.vmem [shape: f32[64,1], index: 4, kind: input, shape index: {}]
  %s5 = inlined_call_operand.hbm [shape: f32[64,256], index: 5, kind: output, shape index: {}]
  %s6 = sld [smem:[#allocation0]]
  $region91: #{tpu_custom_call.1} parent=0
    _
  %s8 = ssub.s32 1, %s6
  %s9 = scalar_select 0, %s8, %s6
  $region1: #{tpu_custom_call.1} parent=0
    #allocation2 [shape = 'u8[65536]{0}', space=vmem, size = 0x10000, scoped, tag = 'input window, operand 0']
    #allocation3 [shape = 'u8[65536]{0}', space=vmem, size = 0x10000, scoped, tag = 'output window, operand 0']
    #allocation4 [shape = 's32[2]{0}', space=sflag, size = 0x8, scoped, tag = 'scoped memory for tpu_custom_call.1']
    %10 = vsyncpa [#allocation4], 0
    %s11 = scalar_lea.sflag [#allocation4], 1
    %12 = vsyncpa %s11, 0
    loop: start=0, step=1, limit=4
    $region2: #{tpu_custom_call.1} parent=1 // loop_pre_header
      _
    $region3: #{tpu_custom_call.1} parent=1 // loop_header
      %s14 = sphi 0, %s18
      %p15 = scmp.ge.s32.totalorder %s14, 4
      %s24 = sphi 0, %s26
      %s27 = sphi 0, %s24
      %s28 = sphi 0, %s27
      %s44 = sphi 0, %s28
      %s50 = sphi 0, %s52
      %s53 = sphi 0, %s50
      %s54 = sphi 0, %s53
      %s70 = sphi 0, %s54
      %s74 = sphi 0, %s74
      %s76 = sphi 0, %s74
      %s77 = sphi 0, %s76
      %s91 = sphi 0, %s77
      %s95 = sphi 0, %s95
      %s97 = sphi 0, %s95
      %s98 = sphi 0, %s97
      %s112 = sphi 0, %s98
      %s116 = sphi 0, %s116
      %s118 = sphi 0, %s116
      %s119 = sphi 0, %s118
      %s133 = sphi 0, %s119
      %s139 = sphi 0, %s141
      %s142 = sphi 0, %s139
      %s143 = sphi 0, %s142
      %s159 = sphi 0, %s143
    $region4: #{tpu_custom_call.1} parent=1 // loop_header_branch
      %17 = sbr.rel (%p15) target = $region8
    $region5: #{tpu_custom_call.1} parent=1 // loop_body
      %s19 = ssub.s32 %s14, 1
      %s20 = ssub.s32 %s14, 2
      %s21 = sadd.s32 %s14, 1
      %s22 = ssub.s32 %s14, %s21
      %p23 = scmp.eq.s32.totalorder %s22, 0
      %s25 = sadd.s32 %s24, 1
      %s26 = scalar_select %p23, %s24, %s25
      %p29 = pneg %p23
      %p30 = scmp.eq.s32.totalorder %s14, 1
      %p31 = por %p29, %p30
      %p32 = scmp.ne.s32.totalorder %s24, %s27
      %p33 = scmp.eq.s32.totalorder %s14, 0
      %p34 = por %p32, %p33
      %p35 = scmp.ne.s32.totalorder %s24, %s27
      %p36 = scmp.eq.s32.totalorder %s19, 1
      %p37 = por %p35, %p36
      %p38 = scmp.ne.s32.totalorder %s27, %s28
      %p39 = scmp.eq.s32.totalorder %s19, 0
      %p40 = por %p38, %p39
      %p41 = scmp.ne.s32.totalorder %s27, %s28
      %p42 = scmp.eq.s32.totalorder %s20, 1
      %p43 = por %p41, %p42
      %p45 = scmp.ne.s32.totalorder %s28, %s44
      %p46 = scmp.eq.s32.totalorder %s20, 0
      %p47 = por %p45, %p46
      %s48 = ssub.s32 %s14, %s21
      %p49 = scmp.eq.s32.totalorder %s48, 0
      %s51 = sadd.s32 %s50, 1
      %s52 = scalar_select %p49, %s50, %s51
      %p55 = pneg %p49
      %p56 = scmp.eq.s32.totalorder %s14, 1
      %p57 = por %p55, %p56
      %p58 = scmp.ne.s32.totalorder %s50, %s53
      %p59 = scmp.eq.s32.totalorder %s14, 0
      %p60 = por %p58, %p59
      %p61 = scmp.ne.s32.totalorder %s50, %s53
      %p62 = scmp.eq.s32.totalorder %s19, 1
      %p63 = por %p61, %p62
      %p64 = scmp.ne.s32.totalorder %s53, %s54
      %p65 = scmp.eq.s32.totalorder %s19, 0
      %p66 = por %p64, %p65
      %p67 = scmp.ne.s32.totalorder %s53, %s54
      %p68 = scmp.eq.s32.totalorder %s20, 1
      %p69 = por %p67, %p68
      %p71 = scmp.ne.s32.totalorder %s54, %s70
      %p72 = scmp.eq.s32.totalorder %s20, 0
      %p73 = por %p71, %p72
      %s75 = sadd.s32 %s74, 1
      %p78 = scmp.eq.s32.totalorder %s14, 1
      %p79 = scmp.ne.s32.totalorder %s74, %s76
      %p80 = scmp.eq.s32.totalorder %s14, 0
      %p81 = por %p79, %p80
      %p82 = scmp.ne.s32.totalorder %s74, %s76
      %p83 = scmp.eq.s32.totalorder %s19, 1
      %p84 = por %p82, %p83
      %p85 = scmp.ne.s32.totalorder %s76, %s77
      %p86 = scmp.eq.s32.totalorder %s19, 0
      %p87 = por %p85, %p86
      %p88 = scmp.ne.s32.totalorder %s76, %s77
      %p89 = scmp.eq.s32.totalorder %s20, 1
      %p90 = por %p88, %p89
      %p92 = scmp.ne.s32.totalorder %s77, %s91
      %p93 = scmp.eq.s32.totalorder %s20, 0
      %p94 = por %p92, %p93
      %s96 = sadd.s32 %s95, 1
      %p99 = scmp.eq.s32.totalorder %s14, 1
      %p100 = scmp.ne.s32.totalorder %s95, %s97
      %p101 = scmp.eq.s32.totalorder %s14, 0
      %p102 = por %p100, %p101
      %p103 = scmp.ne.s32.totalorder %s95, %s97
      %p104 = scmp.eq.s32.totalorder %s19, 1
      %p105 = por %p103, %p104
      %p106 = scmp.ne.s32.totalorder %s97, %s98
      %p107 = scmp.eq.s32.totalorder %s19, 0
      %p108 = por %p106, %p107
      %p109 = scmp.ne.s32.totalorder %s97, %s98
      %p110 = scmp.eq.s32.totalorder %s20, 1
      %p111 = por %p109, %p110
      %p113 = scmp.ne.s32.totalorder %s98, %s112
      %p114 = scmp.eq.s32.totalorder %s20, 0
      %p115 = por %p113, %p114
      %s117 = sadd.s32 %s116, 1
      %p120 = scmp.eq.s32.totalorder %s14, 1
      %p121 = scmp.ne.s32.totalorder %s116, %s118
      %p122 = scmp.eq.s32.totalorder %s14, 0
      %p123 = por %p121, %p122
      %p124 = scmp.ne.s32.totalorder %s116, %s118
      %p125 = scmp.eq.s32.totalorder %s19, 1
      %p126 = por %p124, %p125
      %p127 = scmp.ne.s32.totalorder %s118, %s119
      %p128 = scmp.eq.s32.totalorder %s19, 0
      %p129 = por %p127, %p128
      %p130 = scmp.ne.s32.totalorder %s118, %s119
      %p131 = scmp.eq.s32.totalorder %s20, 1
      %p132 = por %p130, %p131
      %p134 = scmp.ne.s32.totalorder %s119, %s133
      %p135 = scmp.eq.s32.totalorder %s20, 0
      %p136 = por %p134, %p135
      %s137 = ssub.s32 %s14, %s21
      %p138 = scmp.eq.s32.totalorder %s137, 0
      %s140 = sadd.s32 %s139, 1
      %s141 = scalar_select %p138, %s139, %s140
      %p144 = pneg %p138
      %p145 = scmp.eq.s32.totalorder %s14, 1
      %p146 = por %p144, %p145
      %p147 = scmp.ne.s32.totalorder %s139, %s142
      %p148 = scmp.eq.s32.totalorder %s14, 0
      %p149 = por %p147, %p148
      %p150 = scmp.ne.s32.totalorder %s139, %s142
      %p151 = scmp.eq.s32.totalorder %s19, 1
      %p152 = por %p150, %p151
      %p153 = scmp.ne.s32.totalorder %s142, %s143
      %p154 = scmp.eq.s32.totalorder %s19, 0
      %p155 = por %p153, %p154
      %p156 = scmp.ne.s32.totalorder %s142, %s143
      %p157 = scmp.eq.s32.totalorder %s20, 1
      %p158 = por %p156, %p157
      %p160 = scmp.ne.s32.totalorder %s143, %s159
      %p161 = scmp.eq.s32.totalorder %s20, 0
      %p162 = por %p160, %p161
      %p163 = scmp.le.s32.totalorder 1, %s14
      %p164 = scmp.lt.s32.totalorder %s14, 3
      %p165 = pnand %p163, %p164
      %p166 = pneg %p165
      // Predicated region
      $region9: #{tpu_custom_call.1} parent=5 // pred_check
        _
      $region10: #{tpu_custom_call.1} parent=5 // pred_check_branch
        %168 = sbr.rel (%p165) target = $region12
      $region11: #{tpu_custom_call.1} parent=5 // pred_region
        %s169 = ssub.s32 %s14, 1
        // Predicated region
        $region13: #{tpu_custom_call.1} parent=11 // pred_check
          %p170 = pneg %p87
        $region14: #{tpu_custom_call.1} parent=11 // pred_check_branch
          %172 = sbr.rel (%p170) target = $region16
        $region15: #{tpu_custom_call.1} parent=11 // pred_region
          _
        $region16: #{tpu_custom_call.1} parent=11 // pred_fallthru
          _
        // Predicated region
        $region17: #{tpu_custom_call.1} parent=11 // pred_check
          %p173 = pneg %p108
        $region18: #{tpu_custom_call.1} parent=11 // pred_check_branch
          %175 = sbr.rel (%p173) target = $region20
        $region19: #{tpu_custom_call.1} parent=11 // pred_region
          _
        $region20: #{tpu_custom_call.1} parent=11 // pred_fallthru
          _
        // Predicated region
        $region21: #{tpu_custom_call.1} parent=11 // pred_check
          %p176 = pneg %p129
        $region22: #{tpu_custom_call.1} parent=11 // pred_check_branch
          %178 = sbr.rel (%p176) target = $region24
        $region23: #{tpu_custom_call.1} parent=11 // pred_region
          _
        $region24: #{tpu_custom_call.1} parent=11 // pred_fallthru
          _
      $region12: #{tpu_custom_call.1} parent=5 // pred_fallthru
        _
      %p179 = scmp.lt.s32.totalorder %s14, 2
      // Predicated region
      $region25: #{tpu_custom_call.1} parent=5 // pred_check
        %p180 = pneg %p179
      $region26: #{tpu_custom_call.1} parent=5 // pred_check_branch
        %182 = sbr.rel (%p180) target = $region28
      $region27: #{tpu_custom_call.1} parent=5 // pred_region
        // Predicated region
        $region29: #{tpu_custom_call.1} parent=27 // pred_check
          %p183 = pneg %p34
        $region30: #{tpu_custom_call.1} parent=27 // pred_check_branch
          %185 = sbr.rel (%p183) target = $region32
        $region31: #{tpu_custom_call.1} parent=27 // pred_region
          %s186 = sand.u32 %s24, 1
          %s187 = sand.u32 %s24, 1
          %s188 = smul.addr %s187, 64
          %s189 = scalar_lea.vmem [#allocation2], %s188
          %s190 = smul.addr %s14, 8
          %s191 = scalar_lea.vmem %s0, %s190
          // Predicated region
          $region33: #{tpu_custom_call.1} parent=31 // pred_check
            _
          $region34: #{tpu_custom_call.1} parent=31 // pred_check_branch
            %193 = sbr.rel (0) target = $region36
          $region35: #{tpu_custom_call.1} parent=31 // pred_region
            // Predicated region
            $region37: #{tpu_custom_call.1} parent=35 // pred_check
              _
            $region38: #{tpu_custom_call.1} parent=35 // pred_check_branch
              %195 = sbr.rel (0) target = $region40
            $region39: #{tpu_custom_call.1} parent=35 // pred_region
              // Predicated region
              $region52: #{tpu_custom_call.1} parent=39 // pred_check
                _
              $region53: #{tpu_custom_call.1} parent=39 // pred_check_branch
                %224 = sbr.rel (0) target = $region55
              $region54: #{tpu_custom_call.1} parent=39 // pred_region
                loop: start=0, step=1, limit=1
                $region56: #{tpu_custom_call.1} parent=54 // loop_pre_header
                  _
                $region57: #{tpu_custom_call.1} parent=54 // loop_header
                  %s226 = sphi 0, %s230
                  %p227 = scmp.ge.s32.totalorder %s226, 1
                  %s231 = sphi %s191, %s191
                  %s232 = sphi %s189, %s189
                $region58: #{tpu_custom_call.1} parent=54 // loop_header_branch
                  %229 = sbr.rel (%p227) target = $region62
                $region59: #{tpu_custom_call.1} parent=54 // loop_body
                  %v233 = vld [vmem:[%s231] sm:$0xff]
                  %234 = vst [vmem:[%s232] sm:$0xff] %v233
                  %v235 = vld [vmem:[%s231 + $0x10] sm:$0xff]
                  %236 = vst [vmem:[%s232 + $0x8] sm:$0xff] %v235
                  %v237 = vld [vmem:[%s231 + $0x20] sm:$0xff]
                  %238 = vst [vmem:[%s232 + $0x10] sm:$0xff] %v237
                  %v239 = vld [vmem:[%s231 + $0x30] sm:$0xff]
                  %240 = vst [vmem:[%s232 + $0x18] sm:$0xff] %v239
                  %v241 = vld [vmem:[%s231 + $0x40] sm:$0xff]
                  %242 = vst [vmem:[%s232 + $0x20] sm:$0xff] %v241
                  %v243 = vld [vmem:[%s231 + $0x50] sm:$0xff]
                  %244 = vst [vmem:[%s232 + $0x28] sm:$0xff] %v243
                  %v245 = vld [vmem:[%s231 + $0x60] sm:$0xff]
                  %246 = vst [vmem:[%s232 + $0x30] sm:$0xff] %v245
                  %v247 = vld [vmem:[%s231 + $0x70] sm:$0xff]
                  %248 = vst [vmem:[%s232 + $0x38] sm:$0xff] %v247
                $region60: #{tpu_custom_call.1} parent=54 // loop_footer
                  %s230 = sadd.s32 1, %s226
                $region61: #{tpu_custom_call.1} parent=54 // loop_footer_branch
                  %225 = sbr.rel target = $region57
                $region62: #{tpu_custom_call.1} parent=54 // loop_exit
                  _
              $region55: #{tpu_custom_call.1} parent=39 // pred_fallthru
                _
              // Predicated region
              $region63: #{tpu_custom_call.1} parent=39 // pred_check
                _
              $region64: #{tpu_custom_call.1} parent=39 // pred_check_branch
                %250 = sbr.rel target = $region66
              $region65: #{tpu_custom_call.1} parent=39 // pred_region
                _
              $region66: #{tpu_custom_call.1} parent=39 // pred_fallthru
                _
            $region40: #{tpu_custom_call.1} parent=35 // pred_fallthru
              _
            // Predicated region
            $region41: #{tpu_custom_call.1} parent=35 // pred_check
              _
            $region42: #{tpu_custom_call.1} parent=35 // pred_check_branch
              %197 = sbr.rel target = $region44
            $region43: #{tpu_custom_call.1} parent=35 // pred_region
              loop: start=0, step=1, limit=1
              $region45: #{tpu_custom_call.1} parent=43 // loop_pre_header
                _
              $region46: #{tpu_custom_call.1} parent=43 // loop_header
                %s200 = sphi 0, %s204
                %p201 = scmp.ge.s32.totalorder %s200, 1
                %s205 = sphi %s191, %s191
                %s206 = sphi %s189, %s189
              $region47: #{tpu_custom_call.1} parent=43 // loop_header_branch
                %203 = sbr.rel (%p201) target = $region51
              $region48: #{tpu_custom_call.1} parent=43 // loop_body
                %v207 = vld [vmem:[%s205] sm:$0xff]
                %208 = vst [vmem:[%s206] sm:$0xff] %v207
                %v209 = vld [vmem:[%s205 + $0x10] sm:$0xff]
                %210 = vst [vmem:[%s206 + $0x8] sm:$0xff] %v209
                %v211 = vld [vmem:[%s205 + $0x20] sm:$0xff]
                %212 = vst [vmem:[%s206 + $0x10] sm:$0xff] %v211
                %v213 = vld [vmem:[%s205 + $0x30] sm:$0xff]
                %214 = vst [vmem:[%s206 + $0x18] sm:$0xff] %v213
                %v215 = vld [vmem:[%s205 + $0x40] sm:$0xff]
                %216 = vst [vmem:[%s206 + $0x20] sm:$0xff] %v215
                %v217 = vld [vmem:[%s205 + $0x50] sm:$0xff]
                %218 = vst [vmem:[%s206 + $0x28] sm:$0xff] %v217
                %v219 = vld [vmem:[%s205 + $0x60] sm:$0xff]
                %220 = vst [vmem:[%s206 + $0x30] sm:$0xff] %v219
                %v221 = vld [vmem:[%s205 + $0x70] sm:$0xff]
                %222 = vst [vmem:[%s206 + $0x38] sm:$0xff] %v221
              $region49: #{tpu_custom_call.1} parent=43 // loop_footer
                %s204 = sadd.s32 1, %s200
              $region50: #{tpu_custom_call.1} parent=43 // loop_footer_branch
                %199 = sbr.rel target = $region46
              $region51: #{tpu_custom_call.1} parent=43 // loop_exit
                _
            $region44: #{tpu_custom_call.1} parent=35 // pred_fallthru
              _
          $region36: #{tpu_custom_call.1} parent=31 // pred_fallthru
            _
          %251 = vnop
        $region32: #{tpu_custom_call.1} parent=27 // pred_fallthru
          _
        // Predicated region
        $region67: #{tpu_custom_call.1} parent=27 // pred_check
          %p252 = pneg %p60
        $region68: #{tpu_custom_call.1} parent=27 // pred_check_branch
          %254 = sbr.rel (%p252) target = $region70
        $region69: #{tpu_custom_call.1} parent=27 // pred_region
          %p255 = scmp.lt.s32.totalorder %s14, 1
          %s256 = scalar_select %p255, %s14, 1
          %s257 = scalar_lea.vmem %s1, %s256
        $region70: #{tpu_custom_call.1} parent=27 // pred_fallthru
          _
      $region28: #{tpu_custom_call.1} parent=5 // pred_fallthru
        _
      %p258 = scmp.le.s32.totalorder 1, %s14
      %p259 = scmp.lt.s32.totalorder %s14, 3
      %p260 = pnand %p258, %p259
      %p261 = pneg %p260
      // Predicated region
      $region71: #{tpu_custom_call.1} parent=5 // pred_check
        _
      $region72: #{tpu_custom_call.1} parent=5 // pred_check_branch
        %263 = sbr.rel (%p260) target = $region74
      $region73: #{tpu_custom_call.1} parent=5 // pred_region
        %s264 = ssub.s32 %s14, 1
        %s265 = sand.u32 %s27, 1
        %s266 = sand.u32 %s27, 1
        %s267 = smul.addr %s266, 64
        %s268 = scalar_lea.vmem [#allocation2], %s267
        // Predicated region
        $region75: #{tpu_custom_call.1} parent=73 // pred_check
          %p269 = pneg %p40
        $region76: #{tpu_custom_call.1} parent=73 // pred_check_branch
          %271 = sbr.rel (%p269) target = $region78
        $region77: #{tpu_custom_call.1} parent=73 // pred_region
          _
        $region78: #{tpu_custom_call.1} parent=73 // pred_fallthru
          _
        %s272 = sand.u32 %s27, 1
        %s273 = sand.u32 %s27, 1
        %s274 = smul.addr %s273, 64
        %s275 = scalar_lea.vmem [#allocation2], %s274
        %p276 = pneg %p40
        %p277 = pneg %p37
        %p278 = scmp.lt.s32.totalorder %s19, 1
        %s279 = scalar_select %p278, %s19, 1
        %s280 = scalar_lea.vmem %s1, %s279
        %p281 = pneg %p66
        %p282 = pneg %p63
        %p283 = pneg %p87
        %p284 = pneg %p84
        %p285 = pneg %p108
        %p286 = pneg %p105
        %p287 = pneg %p129
        %p288 = pneg %p126
        %p289 = pneg %p155
        %p290 = pneg %p152
        %s291 = sand.u32 %s142, 1
        %s292 = scalar_lea.sflag [#allocation4], %s291
        %s293 = sand.u32 %s142, 1
        %s294 = smul.addr %s293, 64
        %s295 = scalar_lea.vmem [#allocation3], %s294
        %p296 = scmp.lt.s32.totalorder %s19, 1
        %s297 = scalar_select %p296, %s19, 1
        %s298 = scalar_lea.vmem %s1, %s297
        %v299 = vld [vmem:[%s2] sm:$0xff]
        %v300 = vld [vmem:[%s2 + $0x8] sm:$0xff]
        %v301 = vld [vmem:[%s2 + $0x10] sm:$0xff]
        %v302 = vld [vmem:[%s2 + $0x18] sm:$0xff]
        %v303 = vld [vmem:[%s2 + $0x20] sm:$0xff]
        %v304 = vld [vmem:[%s2 + $0x28] sm:$0xff]
        %v305 = vld [vmem:[%s2 + $0x30] sm:$0xff]
        %v306 = vld [vmem:[%s2 + $0x38] sm:$0xff]
        %v307 = vld [vmem:[%s298] sm:$0x1]
        %308 = vset.pattern.permute.xlu0 0
        %309 = vperm.xlu0 %308, %v299
        %v310 = vpop.permute.xlu0 %309
        %311 = vset.pattern.permute.xlu0 0
        %312 = vperm.xlu0 %311, %v300
        %v313 = vpop.permute.xlu0 %312
        %314 = vset.pattern.permute.xlu0 0
        %315 = vperm.xlu0 %314, %v301
        %v316 = vpop.permute.xlu0 %315
        %317 = vset.pattern.permute.xlu0 0
        %318 = vperm.xlu0 %317, %v302
        %v319 = vpop.permute.xlu0 %318
        %320 = vset.pattern.permute.xlu0 0
        %321 = vperm.xlu0 %320, %v303
        %v322 = vpop.permute.xlu0 %321
        %323 = vset.pattern.permute.xlu0 0
        %324 = vperm.xlu0 %323, %v304
        %v325 = vpop.permute.xlu0 %324
        %326 = vset.pattern.permute.xlu0 0
        %327 = vperm.xlu0 %326, %v305
        %v328 = vpop.permute.xlu0 %327
        %329 = vset.pattern.permute.xlu0 0
        %330 = vperm.xlu0 %329, %v306
        %v331 = vpop.permute.xlu0 %330
        %v332 = vlaneseq
        %v333 = vshrl.u32 %v332, 7
        %v334 = vsub.s32 0, %v333
        %v335 = vrot.slane %v307, %v334
        %vm336 = vcmp.lt.s32.totalorder %v310, %v335
        %vm337 = vcmp.lt.s32.totalorder %v313, %v335
        %vm338 = vcmp.lt.s32.totalorder %v316, %v335
        %vm339 = vcmp.lt.s32.totalorder %v319, %v335
        %vm340 = vcmp.lt.s32.totalorder %v322, %v335
        %vm341 = vcmp.lt.s32.totalorder %v325, %v335
        %vm342 = vcmp.lt.s32.totalorder %v328, %v335
        %vm343 = vcmp.lt.s32.totalorder %v331, %v335
        %v344 = vsel %vm336, 1, 0
        %v345 = vsel %vm337, 1, 0
        %v346 = vsel %vm338, 1, 0
        %v347 = vsel %vm339, 1, 0
        %v348 = vsel %vm340, 1, 0
        %v349 = vsel %vm341, 1, 0
        %v350 = vsel %vm342, 1, 0
        %v351 = vsel %vm343, 1, 0
        %v352 = vcvt.s32.f32 %v344
        %v353 = vcvt.s32.f32 %v345
        %v354 = vcvt.s32.f32 %v346
        %v355 = vcvt.s32.f32 %v347
        %v356 = vcvt.s32.f32 %v348
        %v357 = vcvt.s32.f32 %v349
        %v358 = vcvt.s32.f32 %v350
        %v359 = vcvt.s32.f32 %v351
        %v360 = vld [vmem:[%s268] sm:$0xff]
        %v361 = vld [vmem:[%s268 + $0x8] sm:$0xff]
        %v362 = vld [vmem:[%s268 + $0x10] sm:$0xff]
        %v363 = vld [vmem:[%s268 + $0x18] sm:$0xff]
        %v364 = vld [vmem:[%s268 + $0x20] sm:$0xff]
        %v365 = vld [vmem:[%s268 + $0x28] sm:$0xff]
        %v366 = vld [vmem:[%s268 + $0x30] sm:$0xff]
        %v367 = vld [vmem:[%s268 + $0x38] sm:$0xff]
        %v368 = vld [vmem:[%s3] sm:$0xff]
        %v369 = vld [vmem:[%s3 + $0x8] sm:$0xff]
        %v370 = vld [vmem:[%s3 + $0x10] sm:$0xff]
        %v371 = vld [vmem:[%s3 + $0x18] sm:$0xff]
        %v372 = vld [vmem:[%s3 + $0x20] sm:$0xff]
        %v373 = vld [vmem:[%s3 + $0x28] sm:$0xff]
        %v374 = vld [vmem:[%s3 + $0x30] sm:$0xff]
        %v375 = vld [vmem:[%s3 + $0x38] sm:$0xff]
        %377 = vset.pattern.permute.xlu0 0
        %378 = vperm.xlu0 %377, %v368
        %v379 = vpop.permute.xlu0 %378
        %382 = vset.pattern.permute.xlu0 0
        %383 = vperm.xlu0 %382, %v369
        %v384 = vpop.permute.xlu0 %383
        %387 = vset.pattern.permute.xlu0 0
        %388 = vperm.xlu0 %387, %v370
        %v389 = vpop.permute.xlu0 %388
        %392 = vset.pattern.permute.xlu0 0
        %393 = vperm.xlu0 %392, %v371
        %v394 = vpop.permute.xlu0 %393
        %397 = vset.pattern.permute.xlu0 0
        %398 = vperm.xlu0 %397, %v372
        %v399 = vpop.permute.xlu0 %398
        %402 = vset.pattern.permute.xlu0 0
        %403 = vperm.xlu0 %402, %v373
        %v404 = vpop.permute.xlu0 %403
        %407 = vset.pattern.permute.xlu0 0
        %408 = vperm.xlu0 %407, %v374
        %v409 = vpop.permute.xlu0 %408
        %412 = vset.pattern.permute.xlu0 0
        %413 = vperm.xlu0 %412, %v375
        %v414 = vpop.permute.xlu0 %413
        %v416 = vsub.f32 %v360, %v379
        %v417 = vsub.f32 %v361, %v384
        %v418 = vsub.f32 %v362, %v389
        %v419 = vsub.f32 %v363, %v394
        %v420 = vsub.f32 %v364, %v399
        %v421 = vsub.f32 %v365, %v404
        %v422 = vsub.f32 %v366, %v409
        %v423 = vsub.f32 %v367, %v414
        %v424 = vld [vmem:[%s4] sm:$0xff]
        %v425 = vld [vmem:[%s4 + $0x8] sm:$0xff]
        %v426 = vld [vmem:[%s4 + $0x10] sm:$0xff]
        %v427 = vld [vmem:[%s4 + $0x18] sm:$0xff]
        %v428 = vld [vmem:[%s4 + $0x20] sm:$0xff]
        %v429 = vld [vmem:[%s4 + $0x28] sm:$0xff]
        %v430 = vld [vmem:[%s4 + $0x30] sm:$0xff]
        %v431 = vld [vmem:[%s4 + $0x38] sm:$0xff]
        %433 = vset.pattern.permute.xlu0 0
        %434 = vperm.xlu0 %433, %v424
        %v435 = vpop.permute.xlu0 %434
        %438 = vset.pattern.permute.xlu0 0
        %439 = vperm.xlu0 %438, %v425
        %v440 = vpop.permute.xlu0 %439
        %443 = vset.pattern.permute.xlu0 0
        %444 = vperm.xlu0 %443, %v426
        %v445 = vpop.permute.xlu0 %444
        %448 = vset.pattern.permute.xlu0 0
        %449 = vperm.xlu0 %448, %v427
        %v450 = vpop.permute.xlu0 %449
        %453 = vset.pattern.permute.xlu0 0
        %454 = vperm.xlu0 %453, %v428
        %v455 = vpop.permute.xlu0 %454
        %458 = vset.pattern.permute.xlu0 0
        %459 = vperm.xlu0 %458, %v429
        %v460 = vpop.permute.xlu0 %459
        %463 = vset.pattern.permute.xlu0 0
        %464 = vperm.xlu0 %463, %v430
        %v465 = vpop.permute.xlu0 %464
        %468 = vset.pattern.permute.xlu0 0
        %469 = vperm.xlu0 %468, %v431
        %v470 = vpop.permute.xlu0 %469
        %v472 = vmul.f32 %v416, %v435
        %v473 = vmul.f32 %v417, %v440
        %v474 = vmul.f32 %v418, %v445
        %v475 = vmul.f32 %v419, %v450
        %v476 = vmul.f32 %v420, %v455
        %v477 = vmul.f32 %v421, %v460
        %v478 = vmul.f32 %v422, %v465
        %v479 = vmul.f32 %v423, %v470
        %v480 = vmul.f32 %v472, %v352
        %v481 = vmul.f32 %v473, %v353
        %v482 = vmul.f32 %v474, %v354
        %v483 = vmul.f32 %v475, %v355
        %v484 = vmul.f32 %v476, %v356
        %v485 = vmul.f32 %v477, %v357
        %v486 = vmul.f32 %v478, %v358
        %v487 = vmul.f32 %v479, %v359
        %488 = vst [vmem:[%s295] sm:$0xff] %v480
        %489 = vst [vmem:[%s295 + $0x8] sm:$0xff] %v481
        %490 = vst [vmem:[%s295 + $0x10] sm:$0xff] %v482
        %491 = vst [vmem:[%s295 + $0x18] sm:$0xff] %v483
        %492 = vst [vmem:[%s295 + $0x20] sm:$0xff] %v484
        %493 = vst [vmem:[%s295 + $0x28] sm:$0xff] %v485
        %494 = vst [vmem:[%s295 + $0x30] sm:$0xff] %v486
        %495 = vst [vmem:[%s295 + $0x38] sm:$0xff] %v487
        %s496 = sand.u32 %s142, 1
        %s497 = scalar_lea.sflag [#allocation4], %s496
        %s498 = sand.u32 %s142, 1
        %s499 = smul.addr %s498, 64
        %s500 = scalar_lea.vmem [#allocation3], %s499
        // Predicated region
        $region79: #{tpu_custom_call.1} parent=73 // pred_check
          %p501 = pneg %p152
        $region80: #{tpu_custom_call.1} parent=73 // pred_check_branch
          %503 = sbr.rel (%p501) target = $region82
        $region81: #{tpu_custom_call.1} parent=73 // pred_region
          %s505 = ssub.s32 1024, 1024
          %506 = vsyncadd %s497, %s505
          %s507 = smul.addr %s19, 128
          %s508 = scalar_lea.hbm %s5, %s507
          %s509 = sshll.u32 %s500, 4
          %s510 = int_to_ptr.vmem [resolvable:$true] %s509
          %515 = dma.vmem_to_hbm [thread:$0]  %s510, 1024, %s508, %s497, 128, 256, 8
        $region82: #{tpu_custom_call.1} parent=73 // pred_fallthru
          _
      $region74: #{tpu_custom_call.1} parent=5 // pred_fallthru
        _
      %p516 = scmp.le.s32.totalorder 2, %s14
      // Predicated region
      $region83: #{tpu_custom_call.1} parent=5 // pred_check
        %p517 = pneg %p516
      $region84: #{tpu_custom_call.1} parent=5 // pred_check_branch
        %519 = sbr.rel (%p517) target = $region86
      $region85: #{tpu_custom_call.1} parent=5 // pred_region
        %s520 = ssub.s32 %s14, 2
        // Predicated region
        $region87: #{tpu_custom_call.1} parent=85 // pred_check
          %p521 = pneg %p158
        $region88: #{tpu_custom_call.1} parent=85 // pred_check_branch
          %523 = sbr.rel (%p521) target = $region90
        $region89: #{tpu_custom_call.1} parent=85 // pred_region
          %s524 = sand.u32 %s143, 1
          %s525 = scalar_lea.sflag [#allocation4], %s524
          %s526 = sand.u32 %s143, 1
          %s527 = smul.addr %s526, 64
          %s528 = scalar_lea.vmem [#allocation3], %s527
          %529 = dma.done %s525, 1024
        $region90: #{tpu_custom_call.1} parent=85 // pred_fallthru
          _
      $region86: #{tpu_custom_call.1} parent=5 // pred_fallthru
        _
    $region6: #{tpu_custom_call.1} parent=1 // loop_footer
      %s18 = sadd.s32 1, %s14
    $region7: #{tpu_custom_call.1} parent=1 // loop_footer_branch
      %13 = sbr.rel target = $region3
    $region8: #{tpu_custom_call.1} parent=1 // loop_exit
      _
    %530 = vsyncpa [#allocation4], 1
    %s531 = scalar_lea.sflag [#allocation4], 1
    %532 = vsyncpa %s531, 1

</llo_original>
